<compile_context>
chip_gen: v7x
topology: tpu7x:2x2x1
jax: 0.10.0
libtpu: 0.0.40
codegen_flags: <defaults>
</compile_context>

<pallas_src>
import functools

import jax
import jax.numpy as jnp
from jax.experimental import pallas as pl
from jax.experimental.pallas import tpu as pltpu


G_INPUT_DIM = 100           # latent z dimension (module's g_input_dim)
G_OUTPUT_DIM = 784          # MNIST flattened image (module's g_output_dim)
H1, H2, H3 = 64, 128, 256
LEAK = 0.2


def _leaky_relu(h):
    return jnp.where(h >= 0.0, h, LEAK * h)


def generator_kernel(x_ref,
                     w1_ref, b1_ref, w2_ref, b2_ref,
                     w3_ref, b3_ref, w4_ref, b4_ref,
                     o_ref):
    def linear(h, w_ref, b_ref):
        # bf16 operands on the MXU, f32 accumulation, f32 bias add.
        y = jnp.dot(h.astype(jnp.bfloat16), w_ref[...],
                    preferred_element_type=jnp.float32)
        return y + b_ref[...]

    h = x_ref[...]
    h = _leaky_relu(linear(h, w1_ref, b1_ref))
    h = _leaky_relu(linear(h, w2_ref, b2_ref))
    h = _leaky_relu(linear(h, w3_ref, b3_ref))
    o_ref[...] = linear(h, w4_ref, b4_ref).astype(o_ref.dtype)


@functools.partial(jax.jit, static_argnames=("batch_tile",))
def generator_forward(x, params, *, batch_tile=128):
    """x: (B, g_input_dim) f32.  params: (w1,b1,...,w4,b4), weights bf16."""
    B, g_in = x.shape
    (w1, b1, w2, b2, w3, b3, w4, b4) = params
    g_out = w4.shape[1]

    # Batch tiling: a single full-extent tile for small B; otherwise pad to a
    # multiple of `batch_tile` and stream tiles (double-buffered by Pallas).
    if B <= batch_tile:
        tb, b_pad = B, B
        xp = x
    else:
        tb = batch_tile
        b_pad = pl.cdiv(B, tb) * tb
        xp = jnp.pad(x, ((0, b_pad - B), (0, 0)))

    grid = (b_pad // tb,)

    def const(i):                      # weights / biases: resident across tiles
        return (0, 0)

    out = pl.pallas_call(
        generator_kernel,
        out_shape=jax.ShapeDtypeStruct((b_pad, g_out), jnp.float32),
        grid=grid,
        in_specs=[
            pl.BlockSpec((tb, g_in), lambda i: (i, 0)),
            pl.BlockSpec((g_in, H1), const), pl.BlockSpec((1, H1), const),
            pl.BlockSpec((H1, H2), const),   pl.BlockSpec((1, H2), const),
            pl.BlockSpec((H2, H3), const),   pl.BlockSpec((1, H3), const),
            pl.BlockSpec((H3, g_out), const), pl.BlockSpec((1, g_out), const),
        ],
        out_specs=pl.BlockSpec((tb, g_out), lambda i: (i, 0)),
        compiler_params=pltpu.CompilerParams(
            dimension_semantics=("parallel",)),
    )(xp, w1, b1, w2, b2, w3, b3, w4, b4)

    return out[:B] if b_pad != B else out


def init_params(key, g_input_dim, g_output_dim):
    """Deterministic init mimicking torch.nn.Linear default:
    U(-1/sqrt(fan_in), 1/sqrt(fan_in)). Weights stored bf16, biases f32."""
    dims = [(g_input_dim, H1), (H1, H2), (H2, H3), (H3, g_output_dim)]
    params = []
    for (fan_in, fan_out) in dims:
        key, kw, kb = jax.random.split(key, 3)
        bound = 1.0 / jnp.sqrt(float(fan_in))
        w = jax.random.uniform(kw, (fan_in, fan_out), jnp.float32, -bound, bound)
        b = jax.random.uniform(kb, (1, fan_out), jnp.float32, -bound, bound)
        params += [w.astype(jnp.bfloat16), b]
    return tuple(params)


def _reference_forward(x, params):
    """Pure-JAX reference with the same numerics (bf16 operands, f32 accum)."""
    (w1, b1, w2, b2, w3, b3, w4, b4) = params
    h = x
    for (w, b, act) in ((w1, b1, True), (w2, b2, True), (w3, b3, True), (w4, b4, False)):
        h = jnp.dot(h.astype(jnp.bfloat16), w,
                    preferred_element_type=jnp.float32) + b
        if act:
            h = jnp.where(h >= 0.0, h, LEAK * h)
    return h


if __name__ == "__main__":
    key = jax.random.PRNGKey(0)
    key, kx = jax.random.split(key)

    B = 8  # small batch of latent vectors
    x = jax.random.normal(kx, (B, G_INPUT_DIM), jnp.float32)
    params = init_params(key, G_INPUT_DIM, G_OUTPUT_DIM)

    out = generator_forward(x, params)
    out = jax.block_until_ready(out)

    assert out.shape == (B, G_OUTPUT_DIM), out.shape
    ref = _reference_forward(x, params)
    assert bool(jnp.allclose(out, ref, atol=2e-2, rtol=2e-2))
    print("KERNEL_OK")
</pallas_src>

<mosaic_0001>
module attributes {stable_mosaic.version = 11 : i64} {
  func.func @generator_kernel(%arg0: i32, %arg1: memref<8x100xf32, #tpu.memory_space<vmem>>, %arg2: memref<100x64xbf16, #tpu.memory_space<vmem>>, %arg3: memref<1x64xf32, #tpu.memory_space<vmem>>, %arg4: memref<64x128xbf16, #tpu.memory_space<vmem>>, %arg5: memref<1x128xf32, #tpu.memory_space<vmem>>, %arg6: memref<128x256xbf16, #tpu.memory_space<vmem>>, %arg7: memref<1x256xf32, #tpu.memory_space<vmem>>, %arg8: memref<256x784xbf16, #tpu.memory_space<vmem>>, %arg9: memref<1x784xf32, #tpu.memory_space<vmem>>, %arg10: memref<8x784xf32, #tpu.memory_space<vmem>>) attributes {dimension_semantics = [#tpu.dimension_semantics<parallel>], iteration_bounds = array<i64: 1>, scalar_prefetch = 0 : i64, scratch_operands = 0 : i64, tpu.core_type = #tpu.core_type<tc>, window_params = [{transform_indices = @transform_0, window_bounds = array<i64: 8, 100>}, {pipeline_mode = #tpu.pipeline_mode<synchronous>, transform_indices = @transform_1, window_bounds = array<i64: 100, 64>}, {pipeline_mode = #tpu.pipeline_mode<synchronous>, transform_indices = @transform_2, window_bounds = array<i64: 1, 64>}, {pipeline_mode = #tpu.pipeline_mode<synchronous>, transform_indices = @transform_3, window_bounds = array<i64: 64, 128>}, {pipeline_mode = #tpu.pipeline_mode<synchronous>, transform_indices = @transform_4, window_bounds = array<i64: 1, 128>}, {pipeline_mode = #tpu.pipeline_mode<synchronous>, transform_indices = @transform_5, window_bounds = array<i64: 128, 256>}, {pipeline_mode = #tpu.pipeline_mode<synchronous>, transform_indices = @transform_6, window_bounds = array<i64: 1, 256>}, {pipeline_mode = #tpu.pipeline_mode<synchronous>, transform_indices = @transform_7, window_bounds = array<i64: 256, 784>}, {pipeline_mode = #tpu.pipeline_mode<synchronous>, transform_indices = @transform_8, window_bounds = array<i64: 1, 784>}, {transform_indices = @transform_9, window_bounds = array<i64: 8, 784>}]} {
    %c0 = arith.constant 0 : index
    %c0_0 = arith.constant 0 : index
    %0 = vector.load %arg1[%c0, %c0_0] : memref<8x100xf32, #tpu.memory_space<vmem>>, vector<8x100xf32>
    %1 = arith.truncf %0 : vector<8x100xf32> to vector<8x100xbf16>
    %c0_1 = arith.constant 0 : index
    %c0_2 = arith.constant 0 : index
    %2 = vector.load %arg2[%c0_1, %c0_2] : memref<100x64xbf16, #tpu.memory_space<vmem>>, vector<100x64xbf16>
    %cst = arith.constant dense<0.000000e+00> : vector<8x64xf32>
    %3 = tpu.matmul %1, %2, %cst {dimension_numbers = #tpu.dot_dimension_numbers<[1], [0], [0], [1], [0, 0, 1, 1], [], []>} : vector<8x100xbf16>, vector<100x64xbf16>, vector<8x64xf32> -> vector<8x64xf32>
    %c0_3 = arith.constant 0 : index
    %c0_4 = arith.constant 0 : index
    %4 = vector.load %arg3[%c0_3, %c0_4] : memref<1x64xf32, #tpu.memory_space<vmem>>, vector<1x64xf32>
    %5 = vector.broadcast %4 : vector<1x64xf32> to vector<8x64xf32>
    %6 = arith.addf %3, %5 : vector<8x64xf32>
    %cst_5 = arith.constant 0.000000e+00 : f32
    %7 = vector.broadcast %cst_5 : f32 to vector<8x64xf32>
    %8 = arith.cmpf oge, %6, %7 : vector<8x64xf32>
    %cst_6 = arith.constant 2.000000e-01 : f32
    %9 = vector.broadcast %cst_6 : f32 to vector<8x64xf32>
    %10 = arith.mulf %9, %6 : vector<8x64xf32>
    %11 = arith.select %8, %6, %10 : vector<8x64xi1>, vector<8x64xf32>
    %12 = arith.truncf %11 : vector<8x64xf32> to vector<8x64xbf16>
    %c0_7 = arith.constant 0 : index
    %c0_8 = arith.constant 0 : index
    %13 = vector.load %arg4[%c0_7, %c0_8] : memref<64x128xbf16, #tpu.memory_space<vmem>>, vector<64x128xbf16>
    %cst_9 = arith.constant dense<0.000000e+00> : vector<8x128xf32>
    %14 = tpu.matmul %12, %13, %cst_9 {dimension_numbers = #tpu.dot_dimension_numbers<[1], [0], [0], [1], [0, 0, 1, 1], [], []>} : vector<8x64xbf16>, vector<64x128xbf16>, vector<8x128xf32> -> vector<8x128xf32>
    %c0_10 = arith.constant 0 : index
    %c0_11 = arith.constant 0 : index
    %15 = vector.load %arg5[%c0_10, %c0_11] : memref<1x128xf32, #tpu.memory_space<vmem>>, vector<1x128xf32>
    %16 = vector.broadcast %15 : vector<1x128xf32> to vector<8x128xf32>
    %17 = arith.addf %14, %16 : vector<8x128xf32>
    %cst_12 = arith.constant 0.000000e+00 : f32
    %18 = vector.broadcast %cst_12 : f32 to vector<8x128xf32>
    %19 = arith.cmpf oge, %17, %18 : vector<8x128xf32>
    %cst_13 = arith.constant 2.000000e-01 : f32
    %20 = vector.broadcast %cst_13 : f32 to vector<8x128xf32>
    %21 = arith.mulf %20, %17 : vector<8x128xf32>
    %22 = arith.select %19, %17, %21 : vector<8x128xi1>, vector<8x128xf32>
    %23 = arith.truncf %22 : vector<8x128xf32> to vector<8x128xbf16>
    %c0_14 = arith.constant 0 : index
    %c0_15 = arith.constant 0 : index
    %24 = vector.load %arg6[%c0_14, %c0_15] : memref<128x256xbf16, #tpu.memory_space<vmem>>, vector<128x256xbf16>
    %cst_16 = arith.constant dense<0.000000e+00> : vector<8x256xf32>
    %25 = tpu.matmul %23, %24, %cst_16 {dimension_numbers = #tpu.dot_dimension_numbers<[1], [0], [0], [1], [0, 0, 1, 1], [], []>} : vector<8x128xbf16>, vector<128x256xbf16>, vector<8x256xf32> -> vector<8x256xf32>
    %c0_17 = arith.constant 0 : index
    %c0_18 = arith.constant 0 : index
    %26 = vector.load %arg7[%c0_17, %c0_18] : memref<1x256xf32, #tpu.memory_space<vmem>>, vector<1x256xf32>
    %27 = vector.broadcast %26 : vector<1x256xf32> to vector<8x256xf32>
    %28 = arith.addf %25, %27 : vector<8x256xf32>
    %cst_19 = arith.constant 0.000000e+00 : f32
    %29 = vector.broadcast %cst_19 : f32 to vector<8x256xf32>
    %30 = arith.cmpf oge, %28, %29 : vector<8x256xf32>
    %cst_20 = arith.constant 2.000000e-01 : f32
    %31 = vector.broadcast %cst_20 : f32 to vector<8x256xf32>
    %32 = arith.mulf %31, %28 : vector<8x256xf32>
    %33 = arith.select %30, %28, %32 : vector<8x256xi1>, vector<8x256xf32>
    %34 = arith.truncf %33 : vector<8x256xf32> to vector<8x256xbf16>
    %c0_21 = arith.constant 0 : index
    %c0_22 = arith.constant 0 : index
    %35 = vector.load %arg8[%c0_21, %c0_22] : memref<256x784xbf16, #tpu.memory_space<vmem>>, vector<256x784xbf16>
    %cst_23 = arith.constant dense<0.000000e+00> : vector<8x784xf32>
    %36 = tpu.matmul %34, %35, %cst_23 {dimension_numbers = #tpu.dot_dimension_numbers<[1], [0], [0], [1], [0, 0, 1, 1], [], []>} : vector<8x256xbf16>, vector<256x784xbf16>, vector<8x784xf32> -> vector<8x784xf32>
    %c0_24 = arith.constant 0 : index
    %c0_25 = arith.constant 0 : index
    %37 = vector.load %arg9[%c0_24, %c0_25] : memref<1x784xf32, #tpu.memory_space<vmem>>, vector<1x784xf32>
    %38 = vector.broadcast %37 : vector<1x784xf32> to vector<8x784xf32>
    %39 = arith.addf %36, %38 : vector<8x784xf32>
    %c0_26 = arith.constant 0 : index
    %c0_27 = arith.constant 0 : index
    %40 = vector.load %arg10[%c0_26, %c0_27] : memref<8x784xf32, #tpu.memory_space<vmem>>, vector<8x784xf32>
    tpu.vector_store %arg10[%c0_26, %c0_27], %39 {strides = array<i32>} : memref<8x784xf32, #tpu.memory_space<vmem>>, vector<8x784xf32>,
    return
  }
  func.func @transform_0(%arg0: i32) -> (i32, i32) {
    %c0_i32 = arith.constant 0 : i32
    %c0_i32_0 = arith.constant 0 : i32
    return %arg0, %c0_i32 : i32, i32
  }
  func.func @transform_1(%arg0: i32) -> (i32, i32) {
    %c0_i32 = arith.constant 0 : i32
    %c0_i32_0 = arith.constant 0 : i32
    %c0_i32_1 = arith.constant 0 : i32
    return %c0_i32, %c0_i32_0 : i32, i32
  }
  func.func @transform_2(%arg0: i32) -> (i32, i32) {
    %c0_i32 = arith.constant 0 : i32
    %c0_i32_0 = arith.constant 0 : i32
    %c0_i32_1 = arith.constant 0 : i32
    return %c0_i32, %c0_i32_0 : i32, i32
  }
  func.func @transform_3(%arg0: i32) -> (i32, i32) {
    %c0_i32 = arith.constant 0 : i32
    %c0_i32_0 = arith.constant 0 : i32
    %c0_i32_1 = arith.constant 0 : i32
    return %c0_i32, %c0_i32_0 : i32, i32
  }
  func.func @transform_4(%arg0: i32) -> (i32, i32) {
    %c0_i32 = arith.constant 0 : i32
    %c0_i32_0 = arith.constant 0 : i32
    %c0_i32_1 = arith.constant 0 : i32
    return %c0_i32, %c0_i32_0 : i32, i32
  }
  func.func @transform_5(%arg0: i32) -> (i32, i32) {
    %c0_i32 = arith.constant 0 : i32
    %c0_i32_0 = arith.constant 0 : i32
    %c0_i32_1 = arith.constant 0 : i32
    return %c0_i32, %c0_i32_0 : i32, i32
  }
  func.func @transform_6(%arg0: i32) -> (i32, i32) {
    %c0_i32 = arith.constant 0 : i32
    %c0_i32_0 = arith.constant 0 : i32
    %c0_i32_1 = arith.constant 0 : i32
    return %c0_i32, %c0_i32_0 : i32, i32
  }
  func.func @transform_7(%arg0: i32) -> (i32, i32) {
    %c0_i32 = arith.constant 0 : i32
    %c0_i32_0 = arith.constant 0 : i32
    %c0_i32_1 = arith.constant 0 : i32
    return %c0_i32, %c0_i32_0 : i32, i32
  }
  func.func @transform_8(%arg0: i32) -> (i32, i32) {
    %c0_i32 = arith.constant 0 : i32
    %c0_i32_0 = arith.constant 0 : i32
    %c0_i32_1 = arith.constant 0 : i32
    return %c0_i32, %c0_i32_0 : i32, i32
  }
  func.func @transform_9(%arg0: i32) -> (i32, i32) {
    %c0_i32 = arith.constant 0 : i32
    %c0_i32_0 = arith.constant 0 : i32
    return %arg0, %c0_i32 : i32, i32
  }
}

</mosaic_0001>

<llo_original>
// kernel: generator_forward.1
$region0: #{generator_forward.1}
  #allocation0 [shape = 'u32[]', space=smem, size = 0x4, offset = 0x4, fixed_abs, tag = 'smem constant byte address 0x4 - core index']
  #allocation1 [shape = 'u32[144,128]{1,0:T(1,128)}', space=vmem, size = 0x12000, scoped, tag = 'internal scratch']
  %s0 = inlined_call_operand.vmem [shape: f32[8,100], index: 0, kind: input, shape index: {}]
  %s1 = inlined_call_operand.vmem [shape: bf16[100,64], index: 1, kind: input, shape index: {}]
  %s2 = inlined_call_operand.vmem [shape: f32[1,64], index: 2, kind: input, shape index: {}]
  %s3 = inlined_call_operand.vmem [shape: bf16[64,128], index: 3, kind: input, shape index: {}]
  %s4 = inlined_call_operand.vmem [shape: f32[1,128], index: 4, kind: input, shape index: {}]
  %s5 = inlined_call_operand.vmem [shape: bf16[128,256], index: 5, kind: input, shape index: {}]
  %s6 = inlined_call_operand.vmem [shape: f32[1,256], index: 6, kind: input, shape index: {}]
  %s7 = inlined_call_operand.vmem [shape: bf16[256,784], index: 7, kind: input, shape index: {}]
  %s8 = inlined_call_operand.vmem [shape: f32[1,784], index: 8, kind: input, shape index: {}]
  %s9 = inlined_call_operand.hbm [shape: f32[8,784], index: 9, kind: output, shape index: {}]
  %s10 = sld [smem:[#allocation0]]
  $region46: #{generator_forward.1} parent=0
    _
  %s12 = ssub.s32 1, %s10
  %s13 = scalar_select 0, %s12, %s10
  $region1: #{generator_forward.1} parent=0
    #allocation2 [shape = 'u8[28672]{0}', space=vmem, size = 0x7000, scoped, tag = 'output window, operand 0, single buffered']
    #allocation3 [shape = 's32[1]{0}', space=sflag, size = 0x4, scoped, tag = 'scoped memory for generator_forward.1']
    %14 = vsyncpa [#allocation3], 0
    // Predicated region
    $region2: #{generator_forward.1} parent=1 // pred_check
      _
    $region3: #{generator_forward.1} parent=1 // pred_check_branch
      %16 = sbr.rel (0) target = $region5
    $region4: #{generator_forward.1} parent=1 // pred_region
      _
    $region5: #{generator_forward.1} parent=1 // pred_fallthru
      _
    // Predicated region
    $region6: #{generator_forward.1} parent=1 // pred_check
      _
    $region7: #{generator_forward.1} parent=1 // pred_check_branch
      %18 = sbr.rel (0) target = $region9
    $region8: #{generator_forward.1} parent=1 // pred_region
      _
    $region9: #{generator_forward.1} parent=1 // pred_fallthru
      _
    // Predicated region
    $region10: #{generator_forward.1} parent=1 // pred_check
      _
    $region11: #{generator_forward.1} parent=1 // pred_check_branch
      %20 = sbr.rel (0) target = $region13
    $region12: #{generator_forward.1} parent=1 // pred_region
      _
    $region13: #{generator_forward.1} parent=1 // pred_fallthru
      _
    // Predicated region
    $region14: #{generator_forward.1} parent=1 // pred_check
      _
    $region15: #{generator_forward.1} parent=1 // pred_check_branch
      %22 = sbr.rel (0) target = $region17
    $region16: #{generator_forward.1} parent=1 // pred_region
      _
    $region17: #{generator_forward.1} parent=1 // pred_fallthru
      _
    // Predicated region
    $region18: #{generator_forward.1} parent=1 // pred_check
      _
    $region19: #{generator_forward.1} parent=1 // pred_check_branch
      %24 = sbr.rel (0) target = $region21
    $region20: #{generator_forward.1} parent=1 // pred_region
      _
    $region21: #{generator_forward.1} parent=1 // pred_fallthru
      _
    // Predicated region
    $region22: #{generator_forward.1} parent=1 // pred_check
      _
    $region23: #{generator_forward.1} parent=1 // pred_check_branch
      %26 = sbr.rel (0) target = $region25
    $region24: #{generator_forward.1} parent=1 // pred_region
      _
    $region25: #{generator_forward.1} parent=1 // pred_fallthru
      _
    // Predicated region
    $region26: #{generator_forward.1} parent=1 // pred_check
      _
    $region27: #{generator_forward.1} parent=1 // pred_check_branch
      %28 = sbr.rel (0) target = $region29
    $region28: #{generator_forward.1} parent=1 // pred_region
      _
    $region29: #{generator_forward.1} parent=1 // pred_fallthru
      _
    // Predicated region
    $region30: #{generator_forward.1} parent=1 // pred_check
      _
    $region31: #{generator_forward.1} parent=1 // pred_check_branch
      %30 = sbr.rel (0) target = $region33
    $region32: #{generator_forward.1} parent=1 // pred_region
      _
    $region33: #{generator_forward.1} parent=1 // pred_fallthru
      _
    // Predicated region
    $region34: #{generator_forward.1} parent=1 // pred_check
      _
    $region35: #{generator_forward.1} parent=1 // pred_check_branch
      %32 = sbr.rel (0) target = $region37
    $region36: #{generator_forward.1} parent=1 // pred_region
      _
    $region37: #{generator_forward.1} parent=1 // pred_fallthru
      _
    %v34 = vld [vmem:[%s0] sm:$0xff]
    %v35 = vpack.c.bf16 %v34, %v34
    %v36 = vld [vmem:[%s1] sm:$0xf]
    %v37 = vld [vmem:[%s1 + $0x4] sm:$0xf]
    %v38 = vld [vmem:[%s1 + $0x8] sm:$0xf]
    %v39 = vld [vmem:[%s1 + $0xc] sm:$0xf]
    %v40 = vld [vmem:[%s1 + $0x10] sm:$0xf]
    %v41 = vld [vmem:[%s1 + $0x14] sm:$0xf]
    %v42 = vld [vmem:[%s1 + $0x18] sm:$0xf]
    %v43 = vld [vmem:[%s1 + $0x1c] sm:$0xf]
    %v44 = vld [vmem:[%s1 + $0x20] sm:$0xf]
    %v45 = vld [vmem:[%s1 + $0x24] sm:$0xf]
    %v46 = vld [vmem:[%s1 + $0x28] sm:$0xf]
    %v47 = vld [vmem:[%s1 + $0x2c] sm:$0xf]
    %v48 = vld [vmem:[%s1 + $0x30] sm:$0x3]
    %v49 = vld [vmem:[%s2] sm:$0x1]
    %v51 = vlaneseq
    %v52 = vshrl.u32 %v51, 7
    %v53 = vsub.s32 0, %v52
    %v54 = vrot.slane %v49, %v53
    %v69 = vunpack.c.l.b16 %v36
    %v70 = vunpack.c.l.b16 %v37
    %v71 = vunpack.c.l.b16 %v38
    %v72 = vunpack.c.l.b16 %v39
    %v73 = vunpack.c.l.b16 %v40
    %v74 = vunpack.c.l.b16 %v41
    %v75 = vunpack.c.l.b16 %v42
    %v76 = vunpack.c.l.b16 %v43
    %v77 = vunpack.c.l.b16 %v44
    %v78 = vunpack.c.l.b16 %v45
    %v79 = vunpack.c.l.b16 %v46
    %v80 = vunpack.c.l.b16 %v47
    %v81 = vunpack.c.l.b16 %v48
    %v82 = vpack.c.b16 %v70, %v69
    %v83 = vpack.c.b16 %v72, %v71
    %v84 = vpack.c.b16 %v74, %v73
    %v85 = vpack.c.b16 %v76, %v75
    %v86 = vpack.c.b16 %v78, %v77
    %v87 = vpack.c.b16 %v80, %v79
    %v88 = vpack.c.b16 %v81, %v81
    %vm95 = vcmask 818176
    %v97 = vsel %vm95, %v35, 0
    %vm99 = vcmask 1041408
    %v101 = vsel %vm99, %v88, 0
    %103 = vmatprep.subr.bf16.mxu0 0
    %104 = vmatpush1.bf16.msra.mxu0 %v82
    %105 = vmatprep.subr.bf16.mxu0 0
    %106 = vmatpush1.bf16.msra.mxu0 %v83
    %107 = vmatprep.subr.bf16.mxu0 0
    %108 = vmatpush1.bf16.msra.mxu0 %v84
    %109 = vmatprep.subr.bf16.mxu0 0
    %110 = vmatpush1.bf16.msra.mxu0 %v85
    %111 = vmatprep.subr.bf16.mxu0 0
    %112 = vmatpush1.bf16.msra.mxu0 %v86
    %113 = vmatprep.subr.bf16.mxu0 0
    %114 = vmatpush1.bf16.msra.mxu0 %v87
    %115 = vmatprep.subr.bf16.mxu0 0
    %116 = vmatpush1.bf16.msra.mxu0 %v101
    %117 = vmatprep.subr.bf16.mxu0 0
    %118 = vmatpush1.bf16.msra.mxu0 0
    %119 = vmatprep.subr.bf16.mxu0 0
    %120 = vmatpush1.bf16.msra.mxu0 0
    %121 = vmatprep.subr.bf16.mxu0 0
    %122 = vmatpush1.bf16.msra.mxu0 0
    %123 = vmatprep.subr.bf16.mxu0 0
    %124 = vmatpush1.bf16.msra.mxu0 0
    %125 = vmatprep.subr.bf16.mxu0 0
    %126 = vmatpush1.bf16.msra.mxu0 0
    %127 = vmatprep.subr.bf16.mxu0 0
    %128 = vmatpush1.bf16.msra.mxu0 0
    %129 = vmatprep.subr.bf16.mxu0 0
    %130 = vmatpush1.bf16.msra.mxu0 0
    %131 = vmatprep.subr.bf16.mxu0 0
    %132 = vmatpush1.bf16.msra.mxu0 0
    %133 = vmatprep.subr.bf16.mxu0 0
    %134 = vmatpush1.bf16.msra.mxu0 0
    %135 = vmatprep.mubr.bf16.mxu0 0
    %136 = vmatmul.mubr.bf16.gmra.mrb[0].mxu0 %v97
    %v137 = vpop.f32.mrb[0].mxu0
    %v138 = vadd.f32 %v54, %v137
    %v139 = vpop.f32.mrb[0].mxu0
    %v140 = vpop.f32.mrb[0].mxu0
    %v141 = vpop.f32.mrb[0].mxu0
    %142 = vdwg.mxu0
    %vm143 = vcmp.ge.f32.partialorder %v138, 0.0
    %v144 = vmul.f32 %v138, 0.2
    %v145 = vsel %vm143, %v138, %v144
    %v146 = vpack.c.bf16 %v145, %v145
    %v147 = vld [vmem:[%s3] sm:$0xf]
    %v148 = vld [vmem:[%s3 + $0x4] sm:$0xf]
    %v149 = vld [vmem:[%s3 + $0x8] sm:$0xf]
    %v150 = vld [vmem:[%s3 + $0xc] sm:$0xf]
    %v151 = vld [vmem:[%s3 + $0x10] sm:$0xf]
    %v152 = vld [vmem:[%s3 + $0x14] sm:$0xf]
    %v153 = vld [vmem:[%s3 + $0x18] sm:$0xf]
    %v154 = vld [vmem:[%s3 + $0x1c] sm:$0xf]
    %v155 = vld [vmem:[%s4] sm:$0x1]
    %v157 = vlaneseq
    %v158 = vshrl.u32 %v157, 7
    %v159 = vsub.s32 0, %v158
    %v160 = vrot.slane %v155, %v159
    %v170 = vunpack.c.l.b16 %v147
    %v171 = vunpack.c.l.b16 %v148
    %v172 = vunpack.c.l.b16 %v149
    %v173 = vunpack.c.l.b16 %v150
    %v174 = vunpack.c.l.b16 %v151
    %v175 = vunpack.c.l.b16 %v152
    %v176 = vunpack.c.l.b16 %v153
    %v177 = vunpack.c.l.b16 %v154
    %v178 = vpack.c.b16 %v171, %v170
    %v179 = vpack.c.b16 %v173, %v172
    %v180 = vpack.c.b16 %v175, %v174
    %v181 = vpack.c.b16 %v177, %v176
    %vm186 = vcmask 523264
    %v188 = vsel %vm186, %v146, 0
    %190 = vmatprep.subr.bf16.mxu0 0
    %191 = vmatpush1.bf16.msra.mxu0 %v178
    %192 = vmatprep.subr.bf16.mxu0 0
    %193 = vmatpush1.bf16.msra.mxu0 %v179
    %194 = vmatprep.subr.bf16.mxu0 0
    %195 = vmatpush1.bf16.msra.mxu0 %v180
    %196 = vmatprep.subr.bf16.mxu0 0
    %197 = vmatpush1.bf16.msra.mxu0 %v181
    %198 = vmatprep.subr.bf16.mxu0 0
    %199 = vmatpush1.bf16.msra.mxu0 0
    %200 = vmatprep.subr.bf16.mxu0 0
    %201 = vmatpush1.bf16.msra.mxu0 0
    %202 = vmatprep.subr.bf16.mxu0 0
    %203 = vmatpush1.bf16.msra.mxu0 0
    %204 = vmatprep.subr.bf16.mxu0 0
    %205 = vmatpush1.bf16.msra.mxu0 0
    %206 = vmatprep.subr.bf16.mxu0 0
    %207 = vmatpush1.bf16.msra.mxu0 0
    %208 = vmatprep.subr.bf16.mxu0 0
    %209 = vmatpush1.bf16.msra.mxu0 0
    %210 = vmatprep.subr.bf16.mxu0 0
    %211 = vmatpush1.bf16.msra.mxu0 0
    %212 = vmatprep.subr.bf16.mxu0 0
    %213 = vmatpush1.bf16.msra.mxu0 0
    %214 = vmatprep.subr.bf16.mxu0 0
    %215 = vmatpush1.bf16.msra.mxu0 0
    %216 = vmatprep.subr.bf16.mxu0 0
    %217 = vmatpush1.bf16.msra.mxu0 0
    %218 = vmatprep.subr.bf16.mxu0 0
    %219 = vmatpush1.bf16.msra.mxu0 0
    %220 = vmatprep.subr.bf16.mxu0 0
    %221 = vmatpush1.bf16.msra.mxu0 0
    %222 = vmatprep.mubr.bf16.mxu0 0
    %223 = vmatmul.mubr.bf16.gmra.mrb[0].mxu0 %v188
    %v224 = vpop.f32.mrb[0].mxu0
    %v225 = vadd.f32 %v160, %v224
    %v226 = vpop.f32.mrb[0].mxu0
    %v227 = vpop.f32.mrb[0].mxu0
    %v228 = vpop.f32.mrb[0].mxu0
    %229 = vdwg.mxu0
    %vm230 = vcmp.ge.f32.partialorder %v225, 0.0
    %v231 = vmul.f32 %v225, 0.2
    %v232 = vsel %vm230, %v225, %v231
    %v233 = vpack.c.bf16 %v232, %v232
    %v234 = vld [vmem:[%s5] sm:$0xff]
    %v235 = vld [vmem:[%s5 + $0x8] sm:$0xff]
    %v236 = vld [vmem:[%s5 + $0x10] sm:$0xff]
    %v237 = vld [vmem:[%s5 + $0x18] sm:$0xff]
    %v238 = vld [vmem:[%s5 + $0x20] sm:$0xff]
    %v239 = vld [vmem:[%s5 + $0x28] sm:$0xff]
    %v240 = vld [vmem:[%s5 + $0x30] sm:$0xff]
    %v241 = vld [vmem:[%s5 + $0x38] sm:$0xff]
    %v242 = vld [vmem:[%s5 + $0x40] sm:$0xff]
    %v243 = vld [vmem:[%s5 + $0x48] sm:$0xff]
    %v244 = vld [vmem:[%s5 + $0x50] sm:$0xff]
    %v245 = vld [vmem:[%s5 + $0x58] sm:$0xff]
    %v246 = vld [vmem:[%s5 + $0x60] sm:$0xff]
    %v247 = vld [vmem:[%s5 + $0x68] sm:$0xff]
    %v248 = vld [vmem:[%s5 + $0x70] sm:$0xff]
    %v249 = vld [vmem:[%s5 + $0x78] sm:$0xff]
    %v250 = vld [vmem:[%s6] sm:$0x3]
    %v252 = vlaneseq
    %v253 = vshrl.u32 %v252, 7
    %v254 = vsub.s32 0, %v253
    %v255 = vrot.slane %v250, %v254
    %v256 = vlaneseq
    %v257 = vshrl.u32 %v256, 7
    %v258 = vsub.s32 1, %v257
    %v259 = vrot.slane %v250, %v258
    %v278 = vunpack.c.l.b16 %v234
    %v279 = vunpack.c.h.b16 %v234
    %v280 = vunpack.c.l.b16 %v235
    %v281 = vunpack.c.h.b16 %v235
    %v282 = vunpack.c.l.b16 %v236
    %v283 = vunpack.c.h.b16 %v236
    %v284 = vunpack.c.l.b16 %v237
    %v285 = vunpack.c.h.b16 %v237
    %v286 = vunpack.c.l.b16 %v238
    %v287 = vunpack.c.h.b16 %v238
    %v288 = vunpack.c.l.b16 %v239
    %v289 = vunpack.c.h.b16 %v239
    %v290 = vunpack.c.l.b16 %v240
    %v291 = vunpack.c.h.b16 %v240
    %v292 = vunpack.c.l.b16 %v241
    %v293 = vunpack.c.h.b16 %v241
    %v294 = vunpack.c.l.b16 %v242
    %v295 = vunpack.c.h.b16 %v242
    %v296 = vunpack.c.l.b16 %v243
    %v297 = vunpack.c.h.b16 %v243
    %v298 = vunpack.c.l.b16 %v244
    %v299 = vunpack.c.h.b16 %v244
    %v300 = vunpack.c.l.b16 %v245
    %v301 = vunpack.c.h.b16 %v245
    %v302 = vunpack.c.l.b16 %v246
    %v303 = vunpack.c.h.b16 %v246
    %v304 = vunpack.c.l.b16 %v247
    %v305 = vunpack.c.h.b16 %v247
    %v306 = vunpack.c.l.b16 %v248
    %v307 = vunpack.c.h.b16 %v248
    %v308 = vunpack.c.l.b16 %v249
    %v309 = vunpack.c.h.b16 %v249
    %v310 = vpack.c.b16 %v280, %v278
    %v311 = vpack.c.b16 %v281, %v279
    %v312 = vpack.c.b16 %v284, %v282
    %v313 = vpack.c.b16 %v285, %v283
    %v314 = vpack.c.b16 %v288, %v286
    %v315 = vpack.c.b16 %v289, %v287
    %v316 = vpack.c.b16 %v292, %v290
    %v317 = vpack.c.b16 %v293, %v291
    %v318 = vpack.c.b16 %v296, %v294
    %v319 = vpack.c.b16 %v297, %v295
    %v320 = vpack.c.b16 %v300, %v298
    %v321 = vpack.c.b16 %v301, %v299
    %v322 = vpack.c.b16 %v304, %v302
    %v323 = vpack.c.b16 %v305, %v303
    %v324 = vpack.c.b16 %v308, %v306
    %v325 = vpack.c.b16 %v309, %v307
    %342 = vmatprep.subr.bf16.mxu0 %v311
    %343 = vmatpush1.bf16.msra.mxu0 %v310
    %344 = vmatprep.subr.bf16.mxu0 %v313
    %345 = vmatpush1.bf16.msra.mxu0 %v312
    %346 = vmatprep.subr.bf16.mxu0 %v315
    %347 = vmatpush1.bf16.msra.mxu0 %v314
    %348 = vmatprep.subr.bf16.mxu0 %v317
    %349 = vmatpush1.bf16.msra.mxu0 %v316
    %350 = vmatprep.subr.bf16.mxu0 %v319
    %351 = vmatpush1.bf16.msra.mxu0 %v318
    %352 = vmatprep.subr.bf16.mxu0 %v321
    %353 = vmatpush1.bf16.msra.mxu0 %v320
    %354 = vmatprep.subr.bf16.mxu0 %v323
    %355 = vmatpush1.bf16.msra.mxu0 %v322
    %356 = vmatprep.subr.bf16.mxu0 %v325
    %357 = vmatpush1.bf16.msra.mxu0 %v324
    %358 = vmatprep.subr.bf16.mxu0 0
    %359 = vmatpush1.bf16.msra.mxu0 0
    %360 = vmatprep.subr.bf16.mxu0 0
    %361 = vmatpush1.bf16.msra.mxu0 0
    %362 = vmatprep.subr.bf16.mxu0 0
    %363 = vmatpush1.bf16.msra.mxu0 0
    %364 = vmatprep.subr.bf16.mxu0 0
    %365 = vmatpush1.bf16.msra.mxu0 0
    %366 = vmatprep.subr.bf16.mxu0 0
    %367 = vmatpush1.bf16.msra.mxu0 0
    %368 = vmatprep.subr.bf16.mxu0 0
    %369 = vmatpush1.bf16.msra.mxu0 0
    %370 = vmatprep.subr.bf16.mxu0 0
    %371 = vmatpush1.bf16.msra.mxu0 0
    %372 = vmatprep.subr.bf16.mxu0 0
    %373 = vmatpush1.bf16.msra.mxu0 0
    %374 = vmatprep.mubr.bf16.mxu0 0
    %375 = vmatmul.mubr.bf16.gmra.mrb[0].mxu0 %v233
    %v376 = vpop.f32.mrb[0].mxu0
    %v377 = vadd.f32 %v255, %v376
    %v378 = vpop.f32.mrb[0].mxu0
    %v379 = vadd.f32 %v259, %v378
    %v380 = vpop.f32.mrb[0].mxu0
    %v381 = vpop.f32.mrb[0].mxu0
    %382 = vdwg.mxu0
    %vm383 = vcmp.ge.f32.partialorder %v377, 0.0
    %vm384 = vcmp.ge.f32.partialorder %v379, 0.0
    %v385 = vmul.f32 %v377, 0.2
    %v386 = vmul.f32 %v379, 0.2
    %v387 = vsel %vm383, %v377, %v385
    %v388 = vsel %vm384, %v379, %v386
    %v389 = vpack.c.bf16 %v387, %v387
    %v390 = vpack.c.bf16 %v388, %v388
    %v391 = vld [vmem:[%s7] sm:$0xff]
    %v392 = vld [vmem:[%s7 + $0x8] sm:$0xff]
    %v393 = vld [vmem:[%s7 + $0x10] sm:$0xff]
    %v394 = vld [vmem:[%s7 + $0x18] sm:$0xf]
    %v395 = vld [vmem:[%s7 + $0x1c] sm:$0xff]
    %v396 = vld [vmem:[%s7 + $0x24] sm:$0xff]
    %v397 = vld [vmem:[%s7 + $0x2c] sm:$0xff]
    %v398 = vld [vmem:[%s7 + $0x34] sm:$0xf]
    %v399 = vld [vmem:[%s7 + $0x38] sm:$0xff]
    %v400 = vld [vmem:[%s7 + $0x40] sm:$0xff]
    %v401 = vld [vmem:[%s7 + $0x48] sm:$0xff]
    %v402 = vld [vmem:[%s7 + $0x50] sm:$0xf]
    %v403 = vld [vmem:[%s7 + $0x54] sm:$0xff]
    %v404 = vld [vmem:[%s7 + $0x5c] sm:$0xff]
    %v405 = vld [vmem:[%s7 + $0x64] sm:$0xff]
    %v406 = vld [vmem:[%s7 + $0x6c] sm:$0xf]
    %v407 = vld [vmem:[%s7 + $0x70] sm:$0xff]
    %v408 = vld [vmem:[%s7 + $0x78] sm:$0xff]
    %v409 = vld [vmem:[%s7 + $0x80] sm:$0xff]
    %v410 = vld [vmem:[%s7 + $0x88] sm:$0xf]
    %v411 = vld [vmem:[%s7 + $0x8c] sm:$0xff]
    %v412 = vld [vmem:[%s7 + $0x94] sm:$0xff]
    %v413 = vld [vmem:[%s7 + $0x9c] sm:$0xff]
    %v414 = vld [vmem:[%s7 + $0xa4] sm:$0xf]
    %v415 = vld [vmem:[%s7 + $0xa8] sm:$0xff]
    %v416 = vld [vmem:[%s7 + $0xb0] sm:$0xff]
    %v417 = vld [vmem:[%s7 + $0xb8] sm:$0xff]
    %v418 = vld [vmem:[%s7 + $0xc0] sm:$0xf]
    %v419 = vld [vmem:[%s7 + $0xc4] sm:$0xff]
    %v420 = vld [vmem:[%s7 + $0xcc] sm:$0xff]
    %v421 = vld [vmem:[%s7 + $0xd4] sm:$0xff]
    %v422 = vld [vmem:[%s7 + $0xdc] sm:$0xf]
    %v423 = vld [vmem:[%s7 + $0xe0] sm:$0xff]
    %v424 = vld [vmem:[%s7 + $0xe8] sm:$0xff]
    %v425 = vld [vmem:[%s7 + $0xf0] sm:$0xff]
    %v426 = vld [vmem:[%s7 + $0xf8] sm:$0xf]
    %v427 = vld [vmem:[%s7 + $0xfc] sm:$0xff]
    %v428 = vld [vmem:[%s7 + $0x104] sm:$0xff]
    %v429 = vld [vmem:[%s7 + $0x10c] sm:$0xff]
    %v430 = vld [vmem:[%s7 + $0x114] sm:$0xf]
    %v431 = vld [vmem:[%s7 + $0x118] sm:$0xff]
    %v432 = vld [vmem:[%s7 + $0x120] sm:$0xff]
    %v433 = vld [vmem:[%s7 + $0x128] sm:$0xff]
    %v434 = vld [vmem:[%s7 + $0x130] sm:$0xf]
    %v435 = vld [vmem:[%s7 + $0x134] sm:$0xff]
    %v436 = vld [vmem:[%s7 + $0x13c] sm:$0xff]
    %v437 = vld [vmem:[%s7 + $0x144] sm:$0xff]
    %v438 = vld [vmem:[%s7 + $0x14c] sm:$0xf]
    %v439 = vld [vmem:[%s7 + $0x150] sm:$0xff]
    %v440 = vld [vmem:[%s7 + $0x158] sm:$0xff]
    %v441 = vld [vmem:[%s7 + $0x160] sm:$0xff]
    %v442 = vld [vmem:[%s7 + $0x168] sm:$0xf]
    %v443 = vld [vmem:[%s7 + $0x16c] sm:$0xff]
    %v444 = vld [vmem:[%s7 + $0x174] sm:$0xff]
    %v445 = vld [vmem:[%s7 + $0x17c] sm:$0xff]
    %v446 = vld [vmem:[%s7 + $0x184] sm:$0xf]
    %v447 = vld [vmem:[%s7 + $0x188] sm:$0xff]
    %v448 = vld [vmem:[%s7 + $0x190] sm:$0xff]
    %v449 = vld [vmem:[%s7 + $0x198] sm:$0xff]
    %v450 = vld [vmem:[%s7 + $0x1a0] sm:$0xf]
    %v451 = vld [vmem:[%s7 + $0x1a4] sm:$0xff]
    %v452 = vld [vmem:[%s7 + $0x1ac] sm:$0xff]
    %v453 = vld [vmem:[%s7 + $0x1b4] sm:$0xff]
    %v454 = vld [vmem:[%s7 + $0x1bc] sm:$0xf]
    %v455 = vld [vmem:[%s7 + $0x1c0] sm:$0xff]
    %v456 = vld [vmem:[%s7 + $0x1c8] sm:$0xff]
    %v457 = vld [vmem:[%s7 + $0x1d0] sm:$0xff]
    %v458 = vld [vmem:[%s7 + $0x1d8] sm:$0xf]
    %v459 = vld [vmem:[%s7 + $0x1dc] sm:$0xff]
    %v460 = vld [vmem:[%s7 + $0x1e4] sm:$0xff]
    %v461 = vld [vmem:[%s7 + $0x1ec] sm:$0xff]
    %v462 = vld [vmem:[%s7 + $0x1f4] sm:$0xf]
    %v463 = vld [vmem:[%s7 + $0x1f8] sm:$0xff]
    %v464 = vld [vmem:[%s7 + $0x200] sm:$0xff]
    %v465 = vld [vmem:[%s7 + $0x208] sm:$0xff]
    %v466 = vld [vmem:[%s7 + $0x210] sm:$0xf]
    %v467 = vld [vmem:[%s7 + $0x214] sm:$0xff]
    %v468 = vld [vmem:[%s7 + $0x21c] sm:$0xff]
    %v469 = vld [vmem:[%s7 + $0x224] sm:$0xff]
    %v470 = vld [vmem:[%s7 + $0x22c] sm:$0xf]
    %v471 = vld [vmem:[%s7 + $0x230] sm:$0xff]
    %v472 = vld [vmem:[%s7 + $0x238] sm:$0xff]
    %v473 = vld [vmem:[%s7 + $0x240] sm:$0xff]
    %v474 = vld [vmem:[%s7 + $0x248] sm:$0xf]
    %v475 = vld [vmem:[%s7 + $0x24c] sm:$0xff]
    %v476 = vld [vmem:[%s7 + $0x254] sm:$0xff]
    %v477 = vld [vmem:[%s7 + $0x25c] sm:$0xff]
    %v478 = vld [vmem:[%s7 + $0x264] sm:$0xf]
    %v479 = vld [vmem:[%s7 + $0x268] sm:$0xff]
    %v480 = vld [vmem:[%s7 + $0x270] sm:$0xff]
    %v481 = vld [vmem:[%s7 + $0x278] sm:$0xff]
    %v482 = vld [vmem:[%s7 + $0x280] sm:$0xf]
    %v483 = vld [vmem:[%s7 + $0x284] sm:$0xff]
    %v484 = vld [vmem:[%s7 + $0x28c] sm:$0xff]
    %v485 = vld [vmem:[%s7 + $0x294] sm:$0xff]
    %v486 = vld [vmem:[%s7 + $0x29c] sm:$0xf]
    %v487 = vld [vmem:[%s7 + $0x2a0] sm:$0xff]
    %v488 = vld [vmem:[%s7 + $0x2a8] sm:$0xff]
    %v489 = vld [vmem:[%s7 + $0x2b0] sm:$0xff]
    %v490 = vld [vmem:[%s7 + $0x2b8] sm:$0xf]
    %v491 = vld [vmem:[%s7 + $0x2bc] sm:$0xff]
    %v492 = vld [vmem:[%s7 + $0x2c4] sm:$0xff]
    %v493 = vld [vmem:[%s7 + $0x2cc] sm:$0xff]
    %v494 = vld [vmem:[%s7 + $0x2d4] sm:$0xf]
    %v495 = vld [vmem:[%s7 + $0x2d8] sm:$0xff]
    %v496 = vld [vmem:[%s7 + $0x2e0] sm:$0xff]
    %v497 = vld [vmem:[%s7 + $0x2e8] sm:$0xff]
    %v498 = vld [vmem:[%s7 + $0x2f0] sm:$0xf]
    %v499 = vld [vmem:[%s7 + $0x2f4] sm:$0xff]
    %v500 = vld [vmem:[%s7 + $0x2fc] sm:$0xff]
    %v501 = vld [vmem:[%s7 + $0x304] sm:$0xff]
    %v502 = vld [vmem:[%s7 + $0x30c] sm:$0xf]
    %v503 = vld [vmem:[%s7 + $0x310] sm:$0xff]
    %v504 = vld [vmem:[%s7 + $0x318] sm:$0xff]
    %v505 = vld [vmem:[%s7 + $0x320] sm:$0xff]
    %v506 = vld [vmem:[%s7 + $0x328] sm:$0xf]
    %v507 = vld [vmem:[%s7 + $0x32c] sm:$0xff]
    %v508 = vld [vmem:[%s7 + $0x334] sm:$0xff]
    %v509 = vld [vmem:[%s7 + $0x33c] sm:$0xff]
    %v510 = vld [vmem:[%s7 + $0x344] sm:$0xf]
    %v511 = vld [vmem:[%s7 + $0x348] sm:$0xff]
    %v512 = vld [vmem:[%s7 + $0x350] sm:$0xff]
    %v513 = vld [vmem:[%s7 + $0x358] sm:$0xff]
    %v514 = vld [vmem:[%s7 + $0x360] sm:$0xf]
    %v515 = vld [vmem:[%s7 + $0x364] sm:$0xff]
    %v516 = vld [vmem:[%s7 + $0x36c] sm:$0xff]
    %v517 = vld [vmem:[%s7 + $0x374] sm:$0xff]
    %v518 = vld [vmem:[%s7 + $0x37c] sm:$0xf]
    %v519 = vld [vmem:[%s8] sm:$0x7f]
    %v521 = vlaneseq
    %v522 = vshrl.u32 %v521, 7
    %v523 = vsub.s32 0, %v522
    %v524 = vrot.slane %v519, %v523
    %v525 = vlaneseq
    %v526 = vshrl.u32 %v525, 7
    %v527 = vsub.s32 1, %v526
    %v528 = vrot.slane %v519, %v527
    %v529 = vlaneseq
    %v530 = vshrl.u32 %v529, 7
    %v531 = vsub.s32 2, %v530
    %v532 = vrot.slane %v519, %v531
    %v533 = vlaneseq
    %v534 = vshrl.u32 %v533, 7
    %v535 = vsub.s32 3, %v534
    %v536 = vrot.slane %v519, %v535
    %v537 = vlaneseq
    %v538 = vshrl.u32 %v537, 7
    %v539 = vsub.s32 4, %v538
    %v540 = vrot.slane %v519, %v539
    %v541 = vlaneseq
    %v542 = vshrl.u32 %v541, 7
    %v543 = vsub.s32 5, %v542
    %v544 = vrot.slane %v519, %v543
    %v545 = vlaneseq
    %v546 = vshrl.u32 %v545, 7
    %v547 = vsub.s32 6, %v546
    %v548 = vrot.slane %v519, %v547
    %v684 = vunpack.c.l.b16 %v391
    %v685 = vunpack.c.h.b16 %v391
    %v686 = vunpack.c.l.b16 %v392
    %v687 = vunpack.c.h.b16 %v392
    %v688 = vunpack.c.l.b16 %v393
    %v689 = vunpack.c.h.b16 %v393
    %v690 = vunpack.c.l.b16 %v394
    %v691 = vunpack.c.l.b16 %v395
    %v692 = vunpack.c.h.b16 %v395
    %v693 = vunpack.c.l.b16 %v396
    %v694 = vunpack.c.h.b16 %v396
    %v695 = vunpack.c.l.b16 %v397
    %v696 = vunpack.c.h.b16 %v397
    %v697 = vunpack.c.l.b16 %v398
    %v698 = vunpack.c.l.b16 %v399
    %v699 = vunpack.c.h.b16 %v399
    %v700 = vunpack.c.l.b16 %v400
    %v701 = vunpack.c.h.b16 %v400
    %v702 = vunpack.c.l.b16 %v401
    %v703 = vunpack.c.h.b16 %v401
    %v704 = vunpack.c.l.b16 %v402
    %v705 = vunpack.c.l.b16 %v403
    %v706 = vunpack.c.h.b16 %v403
    %v707 = vunpack.c.l.b16 %v404
    %v708 = vunpack.c.h.b16 %v404
    %v709 = vunpack.c.l.b16 %v405
    %v710 = vunpack.c.h.b16 %v405
    %v711 = vunpack.c.l.b16 %v406
    %v712 = vunpack.c.l.b16 %v407
    %v713 = vunpack.c.h.b16 %v407
    %v714 = vunpack.c.l.b16 %v408
    %v715 = vunpack.c.h.b16 %v408
    %v716 = vunpack.c.l.b16 %v409
    %v717 = vunpack.c.h.b16 %v409
    %v718 = vunpack.c.l.b16 %v410
    %v719 = vunpack.c.l.b16 %v411
    %v720 = vunpack.c.h.b16 %v411
    %v721 = vunpack.c.l.b16 %v412
    %v722 = vunpack.c.h.b16 %v412
    %v723 = vunpack.c.l.b16 %v413
    %v724 = vunpack.c.h.b16 %v413
    %v725 = vunpack.c.l.b16 %v414
    %v726 = vunpack.c.l.b16 %v415
    %v727 = vunpack.c.h.b16 %v415
    %v728 = vunpack.c.l.b16 %v416
    %v729 = vunpack.c.h.b16 %v416
    %v730 = vunpack.c.l.b16 %v417
    %v731 = vunpack.c.h.b16 %v417
    %v732 = vunpack.c.l.b16 %v418
    %v733 = vunpack.c.l.b16 %v419
    %v734 = vunpack.c.h.b16 %v419
    %v735 = vunpack.c.l.b16 %v420
    %v736 = vunpack.c.h.b16 %v420
    %v737 = vunpack.c.l.b16 %v421
    %v738 = vunpack.c.h.b16 %v421
    %v739 = vunpack.c.l.b16 %v422
    %v740 = vunpack.c.l.b16 %v423
    %v741 = vunpack.c.h.b16 %v423
    %v742 = vunpack.c.l.b16 %v424
    %v743 = vunpack.c.h.b16 %v424
    %v744 = vunpack.c.l.b16 %v425
    %v745 = vunpack.c.h.b16 %v425
    %v746 = vunpack.c.l.b16 %v426
    %v747 = vunpack.c.l.b16 %v427
    %v748 = vunpack.c.h.b16 %v427
    %v749 = vunpack.c.l.b16 %v428
    %v750 = vunpack.c.h.b16 %v428
    %v751 = vunpack.c.l.b16 %v429
    %v752 = vunpack.c.h.b16 %v429
    %v753 = vunpack.c.l.b16 %v430
    %v754 = vunpack.c.l.b16 %v431
    %v755 = vunpack.c.h.b16 %v431
    %v756 = vunpack.c.l.b16 %v432
    %v757 = vunpack.c.h.b16 %v432
    %v758 = vunpack.c.l.b16 %v433
    %v759 = vunpack.c.h.b16 %v433
    %v760 = vunpack.c.l.b16 %v434
    %v761 = vunpack.c.l.b16 %v435
    %v762 = vunpack.c.h.b16 %v435
    %v763 = vunpack.c.l.b16 %v436
    %v764 = vunpack.c.h.b16 %v436
    %v765 = vunpack.c.l.b16 %v437
    %v766 = vunpack.c.h.b16 %v437
    %v767 = vunpack.c.l.b16 %v438
    %v768 = vunpack.c.l.b16 %v439
    %v769 = vunpack.c.h.b16 %v439
    %v770 = vunpack.c.l.b16 %v440
    %v771 = vunpack.c.h.b16 %v440
    %v772 = vunpack.c.l.b16 %v441
    %v773 = vunpack.c.h.b16 %v441
    %v774 = vunpack.c.l.b16 %v442
    %v775 = vunpack.c.l.b16 %v443
    %v776 = vunpack.c.h.b16 %v443
    %v777 = vunpack.c.l.b16 %v444
    %v778 = vunpack.c.h.b16 %v444
    %v779 = vunpack.c.l.b16 %v445
    %v780 = vunpack.c.h.b16 %v445
    %v781 = vunpack.c.l.b16 %v446
    %v782 = vunpack.c.l.b16 %v447
    %v783 = vunpack.c.h.b16 %v447
    %v784 = vunpack.c.l.b16 %v448
    %v785 = vunpack.c.h.b16 %v448
    %v786 = vunpack.c.l.b16 %v449
    %v787 = vunpack.c.h.b16 %v449
    %v788 = vunpack.c.l.b16 %v450
    %v789 = vunpack.c.l.b16 %v451
    %v790 = vunpack.c.h.b16 %v451
    %v791 = vunpack.c.l.b16 %v452
    %v792 = vunpack.c.h.b16 %v452
    %v793 = vunpack.c.l.b16 %v453
    %v794 = vunpack.c.h.b16 %v453
    %v795 = vunpack.c.l.b16 %v454
    %v796 = vunpack.c.l.b16 %v455
    %v797 = vunpack.c.h.b16 %v455
    %v798 = vunpack.c.l.b16 %v456
    %v799 = vunpack.c.h.b16 %v456
    %v800 = vunpack.c.l.b16 %v457
    %v801 = vunpack.c.h.b16 %v457
    %v802 = vunpack.c.l.b16 %v458
    %v803 = vunpack.c.l.b16 %v459
    %v804 = vunpack.c.h.b16 %v459
    %v805 = vunpack.c.l.b16 %v460
    %v806 = vunpack.c.h.b16 %v460
    %v807 = vunpack.c.l.b16 %v461
    %v808 = vunpack.c.h.b16 %v461
    %v809 = vunpack.c.l.b16 %v462
    %v810 = vunpack.c.l.b16 %v463
    %v811 = vunpack.c.h.b16 %v463
    %v812 = vunpack.c.l.b16 %v464
    %v813 = vunpack.c.h.b16 %v464
    %v814 = vunpack.c.l.b16 %v465
    %v815 = vunpack.c.h.b16 %v465
    %v816 = vunpack.c.l.b16 %v466
    %v817 = vunpack.c.l.b16 %v467
    %v818 = vunpack.c.h.b16 %v467
    %v819 = vunpack.c.l.b16 %v468
    %v820 = vunpack.c.h.b16 %v468
    %v821 = vunpack.c.l.b16 %v469
    %v822 = vunpack.c.h.b16 %v469
    %v823 = vunpack.c.l.b16 %v470
    %v824 = vunpack.c.l.b16 %v471
    %v825 = vunpack.c.h.b16 %v471
    %v826 = vunpack.c.l.b16 %v472
    %v827 = vunpack.c.h.b16 %v472
    %v828 = vunpack.c.l.b16 %v473
    %v829 = vunpack.c.h.b16 %v473
    %v830 = vunpack.c.l.b16 %v474
    %v831 = vunpack.c.l.b16 %v475
    %v832 = vunpack.c.h.b16 %v475
    %v833 = vunpack.c.l.b16 %v476
    %v834 = vunpack.c.h.b16 %v476
    %v835 = vunpack.c.l.b16 %v477
    %v836 = vunpack.c.h.b16 %v477
    %v837 = vunpack.c.l.b16 %v478
    %v838 = vunpack.c.l.b16 %v479
    %v839 = vunpack.c.h.b16 %v479
    %v840 = vunpack.c.l.b16 %v480
    %v841 = vunpack.c.h.b16 %v480
    %v842 = vunpack.c.l.b16 %v481
    %v843 = vunpack.c.h.b16 %v481
    %v844 = vunpack.c.l.b16 %v482
    %v845 = vunpack.c.l.b16 %v483
    %v846 = vunpack.c.h.b16 %v483
    %v847 = vunpack.c.l.b16 %v484
    %v848 = vunpack.c.h.b16 %v484
    %v849 = vunpack.c.l.b16 %v485
    %v850 = vunpack.c.h.b16 %v485
    %v851 = vunpack.c.l.b16 %v486
    %v852 = vunpack.c.l.b16 %v487
    %v853 = vunpack.c.h.b16 %v487
    %v854 = vunpack.c.l.b16 %v488
    %v855 = vunpack.c.h.b16 %v488
    %v856 = vunpack.c.l.b16 %v489
    %v857 = vunpack.c.h.b16 %v489
    %v858 = vunpack.c.l.b16 %v490
    %v859 = vunpack.c.l.b16 %v491
    %v860 = vunpack.c.h.b16 %v491
    %v861 = vunpack.c.l.b16 %v492
    %v862 = vunpack.c.h.b16 %v492
    %v863 = vunpack.c.l.b16 %v493
    %v864 = vunpack.c.h.b16 %v493
    %v865 = vunpack.c.l.b16 %v494
    %v866 = vunpack.c.l.b16 %v495
    %v867 = vunpack.c.h.b16 %v495
    %v868 = vunpack.c.l.b16 %v496
    %v869 = vunpack.c.h.b16 %v496
    %v870 = vunpack.c.l.b16 %v497
    %v871 = vunpack.c.h.b16 %v497
    %v872 = vunpack.c.l.b16 %v498
    %v873 = vunpack.c.l.b16 %v499
    %v874 = vunpack.c.h.b16 %v499
    %v875 = vunpack.c.l.b16 %v500
    %v876 = vunpack.c.h.b16 %v500
    %v877 = vunpack.c.l.b16 %v501
    %v878 = vunpack.c.h.b16 %v501
    %v879 = vunpack.c.l.b16 %v502
    %v880 = vunpack.c.l.b16 %v503
    %v881 = vunpack.c.h.b16 %v503
    %v882 = vunpack.c.l.b16 %v504
    %v883 = vunpack.c.h.b16 %v504
    %v884 = vunpack.c.l.b16 %v505
    %v885 = vunpack.c.h.b16 %v505
    %v886 = vunpack.c.l.b16 %v506
    %v887 = vunpack.c.l.b16 %v507
    %v888 = vunpack.c.h.b16 %v507
    %v889 = vunpack.c.l.b16 %v508
    %v890 = vunpack.c.h.b16 %v508
    %v891 = vunpack.c.l.b16 %v509
    %v892 = vunpack.c.h.b16 %v509
    %v893 = vunpack.c.l.b16 %v510
    %v894 = vunpack.c.l.b16 %v511
    %v895 = vunpack.c.h.b16 %v511
    %v896 = vunpack.c.l.b16 %v512
    %v897 = vunpack.c.h.b16 %v512
    %v898 = vunpack.c.l.b16 %v513
    %v899 = vunpack.c.h.b16 %v513
    %v900 = vunpack.c.l.b16 %v514
    %v901 = vunpack.c.l.b16 %v515
    %v902 = vunpack.c.h.b16 %v515
    %v903 = vunpack.c.l.b16 %v516
    %v904 = vunpack.c.h.b16 %v516
    %v905 = vunpack.c.l.b16 %v517
    %v906 = vunpack.c.h.b16 %v517
    %v907 = vunpack.c.l.b16 %v518
    %v908 = vpack.c.b16 %v691, %v684
    %v909 = vpack.c.b16 %v692, %v685
    %v910 = vpack.c.b16 %v693, %v686
    %v911 = vpack.c.b16 %v694, %v687
    %v912 = vpack.c.b16 %v695, %v688
    %v913 = vpack.c.b16 %v696, %v689
    %v914 = vpack.c.b16 %v697, %v690
    %v915 = vpack.c.b16 %v705, %v698
    %v916 = vpack.c.b16 %v706, %v699
    %v917 = vpack.c.b16 %v707, %v700
    %v918 = vpack.c.b16 %v708, %v701
    %v919 = vpack.c.b16 %v709, %v702
    %v920 = vpack.c.b16 %v710, %v703
    %v921 = vpack.c.b16 %v711, %v704
    %v922 = vpack.c.b16 %v719, %v712
    %v923 = vpack.c.b16 %v720, %v713
    %v924 = vpack.c.b16 %v721, %v714
    %v925 = vpack.c.b16 %v722, %v715
    %v926 = vpack.c.b16 %v723, %v716
    %v927 = vpack.c.b16 %v724, %v717
    %v928 = vpack.c.b16 %v725, %v718
    %v929 = vpack.c.b16 %v733, %v726
    %v930 = vpack.c.b16 %v734, %v727
    %v931 = vpack.c.b16 %v735, %v728
    %v932 = vpack.c.b16 %v736, %v729
    %v933 = vpack.c.b16 %v737, %v730
    %v934 = vpack.c.b16 %v738, %v731
    %v935 = vpack.c.b16 %v739, %v732
    %v936 = vpack.c.b16 %v747, %v740
    %v937 = vpack.c.b16 %v748, %v741
    %v938 = vpack.c.b16 %v749, %v742
    %v939 = vpack.c.b16 %v750, %v743
    %v940 = vpack.c.b16 %v751, %v744
    %v941 = vpack.c.b16 %v752, %v745
    %v942 = vpack.c.b16 %v753, %v746
    %v943 = vpack.c.b16 %v761, %v754
    %v944 = vpack.c.b16 %v762, %v755
    %v945 = vpack.c.b16 %v763, %v756
    %v946 = vpack.c.b16 %v764, %v757
    %v947 = vpack.c.b16 %v765, %v758
    %v948 = vpack.c.b16 %v766, %v759
    %v949 = vpack.c.b16 %v767, %v760
    %v950 = vpack.c.b16 %v775, %v768
    %v951 = vpack.c.b16 %v776, %v769
    %v952 = vpack.c.b16 %v777, %v770
    %v953 = vpack.c.b16 %v778, %v771
    %v954 = vpack.c.b16 %v779, %v772
    %v955 = vpack.c.b16 %v780, %v773
    %v956 = vpack.c.b16 %v781, %v774
    %v957 = vpack.c.b16 %v789, %v782
    %v958 = vpack.c.b16 %v790, %v783
    %v959 = vpack.c.b16 %v791, %v784
    %v960 = vpack.c.b16 %v792, %v785
    %v961 = vpack.c.b16 %v793, %v786
    %v962 = vpack.c.b16 %v794, %v787
    %v963 = vpack.c.b16 %v795, %v788
    %v964 = vpack.c.b16 %v803, %v796
    %v965 = vpack.c.b16 %v804, %v797
    %v966 = vpack.c.b16 %v805, %v798
    %v967 = vpack.c.b16 %v806, %v799
    %v968 = vpack.c.b16 %v807, %v800
    %v969 = vpack.c.b16 %v808, %v801
    %v970 = vpack.c.b16 %v809, %v802
    %v971 = vpack.c.b16 %v817, %v810
    %v972 = vpack.c.b16 %v818, %v811
    %v973 = vpack.c.b16 %v819, %v812
    %v974 = vpack.c.b16 %v820, %v813
    %v975 = vpack.c.b16 %v821, %v814
    %v976 = vpack.c.b16 %v822, %v815
    %v977 = vpack.c.b16 %v823, %v816
    %v978 = vpack.c.b16 %v831, %v824
    %v979 = vpack.c.b16 %v832, %v825
    %v980 = vpack.c.b16 %v833, %v826
    %v981 = vpack.c.b16 %v834, %v827
    %v982 = vpack.c.b16 %v835, %v828
    %v983 = vpack.c.b16 %v836, %v829
    %v984 = vpack.c.b16 %v837, %v830
    %v985 = vpack.c.b16 %v845, %v838
    %v986 = vpack.c.b16 %v846, %v839
    %v987 = vpack.c.b16 %v847, %v840
    %v988 = vpack.c.b16 %v848, %v841
    %v989 = vpack.c.b16 %v849, %v842
    %v990 = vpack.c.b16 %v850, %v843
    %v991 = vpack.c.b16 %v851, %v844
    %v992 = vpack.c.b16 %v859, %v852
    %v993 = vpack.c.b16 %v860, %v853
    %v994 = vpack.c.b16 %v861, %v854
    %v995 = vpack.c.b16 %v862, %v855
    %v996 = vpack.c.b16 %v863, %v856
    %v997 = vpack.c.b16 %v864, %v857
    %v998 = vpack.c.b16 %v865, %v858
    %v999 = vpack.c.b16 %v873, %v866
    %v1000 = vpack.c.b16 %v874, %v867
    %v1001 = vpack.c.b16 %v875, %v868
    %v1002 = vpack.c.b16 %v876, %v869
    %v1003 = vpack.c.b16 %v877, %v870
    %v1004 = vpack.c.b16 %v878, %v871
    %v1005 = vpack.c.b16 %v879, %v872
    %v1006 = vpack.c.b16 %v887, %v880
    %v1007 = vpack.c.b16 %v888, %v881
    %v1008 = vpack.c.b16 %v889, %v882
    %v1009 = vpack.c.b16 %v890, %v883
    %v1010 = vpack.c.b16 %v891, %v884
    %v1011 = vpack.c.b16 %v892, %v885
    %v1012 = vpack.c.b16 %v893, %v886
    %v1013 = vpack.c.b16 %v901, %v894
    %v1014 = vpack.c.b16 %v902, %v895
    %v1015 = vpack.c.b16 %v903, %v896
    %v1016 = vpack.c.b16 %v904, %v897
    %v1017 = vpack.c.b16 %v905, %v898
    %v1018 = vpack.c.b16 %v906, %v899
    %v1019 = vpack.c.b16 %v907, %v900
    %1132 = vmatprep.subr.bf16.mxu0 %v909
    %1133 = vmatpush1.bf16.msra.mxu0 %v908
    %1134 = vmatprep.subr.bf16.mxu0 %v916
    %1135 = vmatpush1.bf16.msra.mxu0 %v915
    %1136 = vmatprep.subr.bf16.mxu0 %v923
    %1137 = vmatpush1.bf16.msra.mxu0 %v922
    %1138 = vmatprep.subr.bf16.mxu0 %v930
    %1139 = vmatpush1.bf16.msra.mxu0 %v929
    %1140 = vmatprep.subr.bf16.mxu0 %v937
    %1141 = vmatpush1.bf16.msra.mxu0 %v936
    %1142 = vmatprep.subr.bf16.mxu0 %v944
    %1143 = vmatpush1.bf16.msra.mxu0 %v943
    %1144 = vmatprep.subr.bf16.mxu0 %v951
    %1145 = vmatpush1.bf16.msra.mxu0 %v950
    %1146 = vmatprep.subr.bf16.mxu0 %v958
    %1147 = vmatpush1.bf16.msra.mxu0 %v957
    %1148 = vmatprep.subr.bf16.mxu0 %v965
    %1149 = vmatpush1.bf16.msra.mxu0 %v964
    %1150 = vmatprep.subr.bf16.mxu0 %v972
    %1151 = vmatpush1.bf16.msra.mxu0 %v971
    %1152 = vmatprep.subr.bf16.mxu0 %v979
    %1153 = vmatpush1.bf16.msra.mxu0 %v978
    %1154 = vmatprep.subr.bf16.mxu0 %v986
    %1155 = vmatpush1.bf16.msra.mxu0 %v985
    %1156 = vmatprep.subr.bf16.mxu0 %v993
    %1157 = vmatpush1.bf16.msra.mxu0 %v992
    %1158 = vmatprep.subr.bf16.mxu0 %v1000
    %1159 = vmatpush1.bf16.msra.mxu0 %v999
    %1160 = vmatprep.subr.bf16.mxu0 %v1007
    %1161 = vmatpush1.bf16.msra.mxu0 %v1006
    %1162 = vmatprep.subr.bf16.mxu0 %v1014
    %1163 = vmatpush1.bf16.msra.mxu0 %v1013
    %1164 = vmatprep.mubr.bf16.mxu0 %v390
    %1165 = vmatmul.mubr.bf16.gmra.mrb[0].mxu0 %v389
    %v1166 = vpop.f32.mrb[0].mxu0
    %v1167 = vadd.f32 %v524, %v1166
    %v1168 = vpop.f32.mrb[0].mxu0
    %v1169 = vadd.f32 %v528, %v1168
    %v1170 = vpop.f32.mrb[0].mxu0
    %v1171 = vpop.f32.mrb[0].mxu0
    %1172 = vdwg.mxu0
    %1173 = vmatprep.subr.bf16.mxu0 %v911
    %1174 = vmatpush1.bf16.msra.mxu0 %v910
    %1175 = vmatprep.subr.bf16.mxu0 %v918
    %1176 = vmatpush1.bf16.msra.mxu0 %v917
    %1177 = vmatprep.subr.bf16.mxu0 %v925
    %1178 = vmatpush1.bf16.msra.mxu0 %v924
    %1179 = vmatprep.subr.bf16.mxu0 %v932
    %1180 = vmatpush1.bf16.msra.mxu0 %v931
    %1181 = vmatprep.subr.bf16.mxu0 %v939
    %1182 = vmatpush1.bf16.msra.mxu0 %v938
    %1183 = vmatprep.subr.bf16.mxu0 %v946
    %1184 = vmatpush1.bf16.msra.mxu0 %v945
    %1185 = vmatprep.subr.bf16.mxu0 %v953
    %1186 = vmatpush1.bf16.msra.mxu0 %v952
    %1187 = vmatprep.subr.bf16.mxu0 %v960
    %1188 = vmatpush1.bf16.msra.mxu0 %v959
    %1189 = vmatprep.subr.bf16.mxu0 %v967
    %1190 = vmatpush1.bf16.msra.mxu0 %v966
    %1191 = vmatprep.subr.bf16.mxu0 %v974
    %1192 = vmatpush1.bf16.msra.mxu0 %v973
    %1193 = vmatprep.subr.bf16.mxu0 %v981
    %1194 = vmatpush1.bf16.msra.mxu0 %v980
    %1195 = vmatprep.subr.bf16.mxu0 %v988
    %1196 = vmatpush1.bf16.msra.mxu0 %v987
    %1197 = vmatprep.subr.bf16.mxu0 %v995
    %1198 = vmatpush1.bf16.msra.mxu0 %v994
    %1199 = vmatprep.subr.bf16.mxu0 %v1002
    %1200 = vmatpush1.bf16.msra.mxu0 %v1001
    %1201 = vmatprep.subr.bf16.mxu0 %v1009
    %1202 = vmatpush1.bf16.msra.mxu0 %v1008
    %1203 = vmatprep.subr.bf16.mxu0 %v1016
    %1204 = vmatpush1.bf16.msra.mxu0 %v1015
    %1205 = vmatprep.mubr.bf16.mxu0 %v390
    %1206 = vmatmul.mubr.bf16.gmra.mrb[0].mxu0 %v389
    %v1207 = vpop.f32.mrb[0].mxu0
    %v1208 = vadd.f32 %v532, %v1207
    %v1209 = vpop.f32.mrb[0].mxu0
    %v1210 = vadd.f32 %v536, %v1209
    %v1211 = vpop.f32.mrb[0].mxu0
    %v1212 = vpop.f32.mrb[0].mxu0
    %1213 = vdwg.mxu0
    %1214 = vmatprep.subr.bf16.mxu0 %v913
    %1215 = vmatpush1.bf16.msra.mxu0 %v912
    %1216 = vmatprep.subr.bf16.mxu0 %v920
    %1217 = vmatpush1.bf16.msra.mxu0 %v919
    %1218 = vmatprep.subr.bf16.mxu0 %v927
    %1219 = vmatpush1.bf16.msra.mxu0 %v926
    %1220 = vmatprep.subr.bf16.mxu0 %v934
    %1221 = vmatpush1.bf16.msra.mxu0 %v933
    %1222 = vmatprep.subr.bf16.mxu0 %v941
    %1223 = vmatpush1.bf16.msra.mxu0 %v940
    %1224 = vmatprep.subr.bf16.mxu0 %v948
    %1225 = vmatpush1.bf16.msra.mxu0 %v947
    %1226 = vmatprep.subr.bf16.mxu0 %v955
    %1227 = vmatpush1.bf16.msra.mxu0 %v954
    %1228 = vmatprep.subr.bf16.mxu0 %v962
    %1229 = vmatpush1.bf16.msra.mxu0 %v961
    %1230 = vmatprep.subr.bf16.mxu0 %v969
    %1231 = vmatpush1.bf16.msra.mxu0 %v968
    %1232 = vmatprep.subr.bf16.mxu0 %v976
    %1233 = vmatpush1.bf16.msra.mxu0 %v975
    %1234 = vmatprep.subr.bf16.mxu0 %v983
    %1235 = vmatpush1.bf16.msra.mxu0 %v982
    %1236 = vmatprep.subr.bf16.mxu0 %v990
    %1237 = vmatpush1.bf16.msra.mxu0 %v989
    %1238 = vmatprep.subr.bf16.mxu0 %v997
    %1239 = vmatpush1.bf16.msra.mxu0 %v996
    %1240 = vmatprep.subr.bf16.mxu0 %v1004
    %1241 = vmatpush1.bf16.msra.mxu0 %v1003
    %1242 = vmatprep.subr.bf16.mxu0 %v1011
    %1243 = vmatpush1.bf16.msra.mxu0 %v1010
    %1244 = vmatprep.subr.bf16.mxu0 %v1018
    %1245 = vmatpush1.bf16.msra.mxu0 %v1017
    %1246 = vmatprep.mubr.bf16.mxu0 %v390
    %1247 = vmatmul.mubr.bf16.gmra.mrb[0].mxu0 %v389
    %v1248 = vpop.f32.mrb[0].mxu0
    %v1249 = vadd.f32 %v540, %v1248
    %v1250 = vpop.f32.mrb[0].mxu0
    %v1251 = vadd.f32 %v544, %v1250
    %v1252 = vpop.f32.mrb[0].mxu0
    %v1253 = vpop.f32.mrb[0].mxu0
    %1254 = vdwg.mxu0
    %1255 = vmatprep.subr.bf16.mxu0 0
    %1256 = vmatpush1.bf16.msra.mxu0 %v914
    %1257 = vmatprep.subr.bf16.mxu0 0
    %1258 = vmatpush1.bf16.msra.mxu0 %v921
    %1259 = vmatprep.subr.bf16.mxu0 0
    %1260 = vmatpush1.bf16.msra.mxu0 %v928
    %1261 = vmatprep.subr.bf16.mxu0 0
    %1262 = vmatpush1.bf16.msra.mxu0 %v935
    %1263 = vmatprep.subr.bf16.mxu0 0
    %1264 = vmatpush1.bf16.msra.mxu0 %v942
    %1265 = vmatprep.subr.bf16.mxu0 0
    %1266 = vmatpush1.bf16.msra.mxu0 %v949
    %1267 = vmatprep.subr.bf16.mxu0 0
    %1268 = vmatpush1.bf16.msra.mxu0 %v956
    %1269 = vmatprep.subr.bf16.mxu0 0
    %1270 = vmatpush1.bf16.msra.mxu0 %v963
    %1271 = vmatprep.subr.bf16.mxu0 0
    %1272 = vmatpush1.bf16.msra.mxu0 %v970
    %1273 = vmatprep.subr.bf16.mxu0 0
    %1274 = vmatpush1.bf16.msra.mxu0 %v977
    %1275 = vmatprep.subr.bf16.mxu0 0
    %1276 = vmatpush1.bf16.msra.mxu0 %v984
    %1277 = vmatprep.subr.bf16.mxu0 0
    %1278 = vmatpush1.bf16.msra.mxu0 %v991
    %1279 = vmatprep.subr.bf16.mxu0 0
    %1280 = vmatpush1.bf16.msra.mxu0 %v998
    %1281 = vmatprep.subr.bf16.mxu0 0
    %1282 = vmatpush1.bf16.msra.mxu0 %v1005
    %1283 = vmatprep.subr.bf16.mxu0 0
    %1284 = vmatpush1.bf16.msra.mxu0 %v1012
    %1285 = vmatprep.subr.bf16.mxu0 0
    %1286 = vmatpush1.bf16.msra.mxu0 %v1019
    %1287 = vmatprep.mubr.bf16.mxu0 %v390
    %1288 = vmatmul.mubr.bf16.gmra.mrb[0].mxu0 %v389
    %v1289 = vpop.f32.mrb[0].mxu0
    %v1290 = vadd.f32 %v548, %v1289
    %v1291 = vpop.f32.mrb[0].mxu0
    %v1292 = vpop.f32.mrb[0].mxu0
    %v1293 = vpop.f32.mrb[0].mxu0
    %1294 = vdwg.mxu0
    %1295 = vst [vmem:[#allocation2] sm:$0xff] %v1167
    %1296 = vst [vmem:[#allocation2 + $0x8] sm:$0xff] %v1169
    %1297 = vst [vmem:[#allocation2 + $0x10] sm:$0xff] %v1208
    %1298 = vst [vmem:[#allocation2 + $0x18] sm:$0xff] %v1210
    %1299 = vst [vmem:[#allocation2 + $0x20] sm:$0xff] %v1249
    %1300 = vst [vmem:[#allocation2 + $0x28] sm:$0xff] %v1251
    %vm1301 = vcmask 130048
    %1302 = vst.msk [vmem:[#allocation2 + $0x30] sm:$0xff] %vm1301, %v1290
    // Predicated region
    $region38: #{generator_forward.1} parent=1 // pred_check
      _
    $region39: #{generator_forward.1} parent=1 // pred_check_branch
      %1304 = sbr.rel (0) target = $region41
    $region40: #{generator_forward.1} parent=1 // pred_region
      %s1306 = ssub.s32 896, 896
      %1307 = vsyncadd [#allocation3], %s1306
      %s1309 = sshll.u32 [#allocation2], 4
      %s1310 = int_to_ptr.vmem [resolvable:$true] %s1309
      %1312 = dma.vmem_to_hbm [thread:$0]  %s1310, 896, %s9, [#allocation3]
    $region41: #{generator_forward.1} parent=1 // pred_fallthru
      _
    // Predicated region
    $region42: #{generator_forward.1} parent=1 // pred_check
      _
    $region43: #{generator_forward.1} parent=1 // pred_check_branch
      %1314 = sbr.rel (0) target = $region45
    $region44: #{generator_forward.1} parent=1 // pred_region
      %1315 = dma.done [#allocation3], 896
    $region45: #{generator_forward.1} parent=1 // pred_fallthru
      _
    %1316 = vsyncpa [#allocation3], 1

</llo_original>
